<compile_context>
chip_gen: v7x
topology: tpu7x:2x2x1
jax: 0.10.0
libtpu: 0.0.40
codegen_flags: <defaults>
</compile_context>

<pallas_src>
import jax
import jax.numpy as jnp
from jax.experimental import pallas as pl
from jax.experimental.pallas import tpu as pltpu


def _round_up(v, m):
    return ((v + m - 1) // m) * m


def _pick_tile(dim, target, align):
    """Largest multiple of `align` that divides `dim` and is <= target.

    `dim` is already a multiple of `align`, so `align` is a valid fallback.
    """
    t = min(target, dim)
    t -= t % align
    while t > align:
        if dim % t == 0:
            return t
        t -= align
    return align


def _matmul_kernel(x_ref, w_ref, o_ref):
    # x_ref: (tm, tk) bf16, w_ref: (tk, tn) bf16 (K,N layout -> no transpose),
    # o_ref: (tm, tn) f32, k-invariant -> acts as the VMEM-resident accumulator.
    k = pl.program_id(2)
    partial = jnp.dot(x_ref[...], w_ref[...], preferred_element_type=jnp.float32)

    @pl.when(k == 0)
    def _():
        o_ref[...] = partial

    @pl.when(k > 0)
    def _():
        o_ref[...] = o_ref[...] + partial


def preprocess_weight(w):
    """One-time weight prep (do this at module init, not per forward call).

    w: (ydim, xdim) torch nn.Linear layout.
    Returns (wp, (K, N)): wp is the (Kp, Np) bf16 zero-padded transposed weight.
    """
    N, K = w.shape
    Kp, Np = _round_up(K, 128), _round_up(N, 128)
    wp = (
        jnp.zeros((Kp, Np), jnp.bfloat16)
        .at[:K, :N]
        .set(jnp.asarray(w, jnp.bfloat16).T)
    )
    return wp, (K, N)


def mock_perceptron_forward(x, wp, kn, *, tm=512, tn=512, tk=1024):
    """y = x @ W.T via a tiled bf16 Pallas matmul with f32 accumulation.

    x:  (B, xdim) float array.
    wp: preprocessed weight from preprocess_weight (Kp, Np) bf16.
    kn: (xdim, ydim) logical sizes of the original weight.
    """
    B, K = x.shape
    Kp, Np = wp.shape
    Kw, N = kn
    assert K == Kw, (K, Kw)

    # Pad activations only to hardware granularity: M -> 16 (bf16 sublane
    # packing), K already padded to 128 on the weight side.
    Mp = _round_up(B, 16)
    xp = (
        jnp.zeros((Mp, Kp), jnp.bfloat16)
        .at[:B, :K]
        .set(jnp.asarray(x, jnp.bfloat16))
    )

    # Tiles must divide the padded dims (no pad-to-tile-multiple waste).
    tm = _pick_tile(Mp, tm, 16)
    tn = _pick_tile(Np, tn, 128)
    tk = _pick_tile(Kp, tk, 128)

    # Guarantee >= 2 parallel output blocks so both v7x TensorCores get work.
    if (Mp // tm) * (Np // tn) < 2:
        if tn >= 256:
            tn //= 2
        elif tm >= 32 and tm % 32 == 0:
            tm //= 2

    grid = (Mp // tm, Np // tn, Kp // tk)

    # Deepen the W pipeline in the W-streaming (long-K) regime.
    if grid[2] >= 3:
        w_spec = pl.BlockSpec(
            (tk, tn), lambda i, j, k: (k, j), pipeline_mode=pl.Buffered(3)
        )
        w_bufs = 3
    else:
        w_spec = pl.BlockSpec((tk, tn), lambda i, j, k: (k, j))
        w_bufs = 2

    # Scoped-VMEM budget: double-buffered x, (2-3)-buffered W, resident f32 out.
    vmem_bytes = 2 * tm * tk * 2 + w_bufs * tk * tn * 2 + 2 * tm * tn * 4
    vmem_limit = int(min(max(2 * vmem_bytes, 32 << 20), 64 << 20))

    cost = pl.CostEstimate(
        flops=2 * Mp * Np * Kp,
        transcendentals=0,
        bytes_accessed=Mp * Kp * 2 + Kp * Np * 2 + Mp * Np * 4,
    )

    out_padded = pl.pallas_call(
        _matmul_kernel,
        out_shape=jax.ShapeDtypeStruct((Mp, Np), jnp.float32),
        grid_spec=pltpu.PrefetchScalarGridSpec(
            num_scalar_prefetch=0,
            grid=grid,
            in_specs=[
                pl.BlockSpec((tm, tk), lambda i, j, k: (i, k)),
                w_spec,
            ],
            out_specs=pl.BlockSpec((tm, tn), lambda i, j, k: (i, j)),
        ),
        compiler_params=pltpu.CompilerParams(
            dimension_semantics=("parallel", "parallel", "arbitrary"),
            vmem_limit_bytes=vmem_limit,
        ),
        cost_estimate=cost,
    )(xp, wp)

    return out_padded[:B, :N]


if __name__ == "__main__":
    key = jax.random.PRNGKey(0)
    kx1, kw1, kx2, kw2 = jax.random.split(key, 4)

    def run_case(kx, kw, batch, xdim, ydim, **tiles):
        x = jax.random.normal(kx, (batch, xdim), dtype=jnp.float32)
        # Mimic nn.Linear default init U(-1/sqrt(xdim), 1/sqrt(xdim)).
        bound = 1.0 / (xdim ** 0.5)
        w = jax.random.uniform(
            kw, (ydim, xdim), dtype=jnp.float32, minval=-bound, maxval=bound
        )

        wp, kn = preprocess_weight(w)  # one-time ("module init") weight prep
        y = jax.block_until_ready(mock_perceptron_forward(x, wp, kn, **tiles))

        # Reference with the same bf16 operand rounding, f32 accumulation.
        xb = x.astype(jnp.bfloat16).astype(jnp.float32)
        wb = w.astype(jnp.bfloat16).astype(jnp.float32)
        y_ref = xb @ wb.T

        assert y.shape == (batch, ydim)
        err = float(jnp.max(jnp.abs(y - y_ref)))
        assert jnp.allclose(y, y_ref, atol=2e-3, rtol=2e-3), err
        return y

    # Small shape consistent with the module (single-block path).
    run_case(kx1, kw1, batch=8, xdim=32, ydim=16)

    # Still-small multi-tile case: exercises K accumulation into o_ref, the
    # Buffered(3) W pipeline, and the multi-block parallel grid.
    run_case(kx2, kw2, batch=24, xdim=384, ydim=272, tm=16, tn=128, tk=128)

    print("KERNEL_OK")
</pallas_src>

<mosaic_0001>
module attributes {stable_mosaic.version = 11 : i64} {
  func.func @_matmul_kernel(%arg0: i32, %arg1: i32, %arg2: i32, %arg3: memref<16x128xbf16, #tpu.memory_space<vmem>>, %arg4: memref<128x128xbf16, #tpu.memory_space<vmem>>, %arg5: memref<16x128xf32, #tpu.memory_space<vmem>>) attributes {dimension_semantics = [#tpu.dimension_semantics<parallel>, #tpu.dimension_semantics<parallel>, #tpu.dimension_semantics<arbitrary>], iteration_bounds = array<i64: 1, 1, 1>, scalar_prefetch = 0 : i64, scratch_operands = 0 : i64, tpu.core_type = #tpu.core_type<tc>, window_params = [{transform_indices = @transform_0, window_bounds = array<i64: 16, 128>}, {transform_indices = @transform_1, window_bounds = array<i64: 128, 128>}, {transform_indices = @transform_2, window_bounds = array<i64: 16, 128>}]} {
    %c0 = arith.constant 0 : index
    %c0_0 = arith.constant 0 : index
    %0 = vector.load %arg3[%c0, %c0_0] : memref<16x128xbf16, #tpu.memory_space<vmem>>, vector<16x128xbf16>
    %c0_1 = arith.constant 0 : index
    %c0_2 = arith.constant 0 : index
    %1 = vector.load %arg4[%c0_1, %c0_2] : memref<128x128xbf16, #tpu.memory_space<vmem>>, vector<128x128xbf16>
    %cst = arith.constant dense<0.000000e+00> : vector<16x128xf32>
    %2 = tpu.matmul %0, %1, %cst {dimension_numbers = #tpu.dot_dimension_numbers<[1], [0], [0], [1], [0, 0, 1, 1], [], []>} : vector<16x128xbf16>, vector<128x128xbf16>, vector<16x128xf32> -> vector<16x128xf32>
    %c0_i32 = arith.constant 0 : i32
    %3 = arith.cmpi eq, %arg2, %c0_i32 : i32
    %4 = arith.extui %3 : i1 to i32
    %c0_i32_3 = arith.constant 0 : i32
    %5 = arith.cmpi ne, %4, %c0_i32_3 : i32
    scf.if %5 {
      %c0_6 = arith.constant 0 : index
      %c0_7 = arith.constant 0 : index
      %9 = vector.load %arg5[%c0_6, %c0_7] : memref<16x128xf32, #tpu.memory_space<vmem>>, vector<16x128xf32>
      tpu.vector_store %arg5[%c0_6, %c0_7], %2 {strides = array<i32>} : memref<16x128xf32, #tpu.memory_space<vmem>>, vector<16x128xf32>,
    } else {
    }
    %c0_i32_4 = arith.constant 0 : i32
    %6 = arith.cmpi sgt, %arg2, %c0_i32_4 : i32
    %7 = arith.extui %6 : i1 to i32
    %c0_i32_5 = arith.constant 0 : i32
    %8 = arith.cmpi ne, %7, %c0_i32_5 : i32
    scf.if %8 {
      %c0_6 = arith.constant 0 : index
      %c0_7 = arith.constant 0 : index
      %9 = vector.load %arg5[%c0_6, %c0_7] : memref<16x128xf32, #tpu.memory_space<vmem>>, vector<16x128xf32>
      %10 = arith.addf %9, %2 : vector<16x128xf32>
      %c0_8 = arith.constant 0 : index
      %c0_9 = arith.constant 0 : index
      %11 = vector.load %arg5[%c0_8, %c0_9] : memref<16x128xf32, #tpu.memory_space<vmem>>, vector<16x128xf32>
      tpu.vector_store %arg5[%c0_8, %c0_9], %10 {strides = array<i32>} : memref<16x128xf32, #tpu.memory_space<vmem>>, vector<16x128xf32>,
    } else {
    }
    return
  }
  func.func @transform_0(%arg0: i32, %arg1: i32, %arg2: i32) -> (i32, i32) {
    %c0_i32 = arith.constant 0 : i32
    return %arg0, %arg2 : i32, i32
  }
  func.func @transform_1(%arg0: i32, %arg1: i32, %arg2: i32) -> (i32, i32) {
    %c0_i32 = arith.constant 0 : i32
    return %arg2, %arg1 : i32, i32
  }
  func.func @transform_2(%arg0: i32, %arg1: i32, %arg2: i32) -> (i32, i32) {
    %c0_i32 = arith.constant 0 : i32
    return %arg0, %arg1 : i32, i32
  }
}

</mosaic_0001>

<llo_original>
// kernel: tpu_custom_call.1
$region0: #{tpu_custom_call.1}
  #allocation0 [shape = 'u32[]', space=smem, size = 0x4, offset = 0x4, fixed_abs, tag = 'smem constant byte address 0x4 - core index']
  #allocation1 [shape = 'u32[144,128]{1,0:T(1,128)}', space=vmem, size = 0x12000, scoped, tag = 'internal scratch']
  %s0 = inlined_call_operand.hbm [shape: bf16[16,128], index: 0, kind: input, shape index: {}]
  %s1 = inlined_call_operand.hbm [shape: bf16[128,128], index: 1, kind: input, shape index: {}]
  %s2 = inlined_call_operand.hbm [shape: f32[16,128], index: 2, kind: output, shape index: {}]
  %s3 = sld [smem:[#allocation0]]
  $region34: #{tpu_custom_call.1} parent=0
    _
  %s5 = ssub.s32 1, %s3
  %s6 = scalar_select 0, %s5, %s3
  $region1: #{tpu_custom_call.1} parent=0
    #allocation2 [shape = 'u8[4096]{0}', space=vmem, size = 0x1000, scoped, tag = 'input window, operand 0, single buffered']
    #allocation3 [shape = 's32[1]{0}', space=sflag, size = 0x4, scoped, tag = 'scoped memory for tpu_custom_call.1']
    #allocation4 [shape = 's32[1]{0}', space=sflag, size = 0x4, scoped, tag = 'scoped memory for tpu_custom_call.1']
    #allocation5 [shape = 'u8[32768]{0}', space=vmem, size = 0x8000, scoped, tag = 'input window, operand 1, single buffered']
    #allocation6 [shape = 's32[1]{0}', space=sflag, size = 0x4, scoped, tag = 'scoped memory for tpu_custom_call.1']
    #allocation7 [shape = 'u8[8192]{0}', space=vmem, size = 0x2000, scoped, tag = 'output window, operand 0, single buffered']
    %7 = vsyncpa [#allocation3], 0
    %8 = vsyncpa [#allocation6], 0
    %9 = vsyncpa [#allocation4], 0
    // Predicated region
    $region2: #{tpu_custom_call.1} parent=1 // pred_check
      _
    $region3: #{tpu_custom_call.1} parent=1 // pred_check_branch
      %11 = sbr.rel (0) target = $region5
    $region4: #{tpu_custom_call.1} parent=1 // pred_region
      %s13 = ssub.s32 128, 128
      %14 = vsyncadd [#allocation3], %s13
      %s15 = sshll.u32 [#allocation2], 4
      %s16 = int_to_ptr.vmem [resolvable:$true] %s15
      %21 = dma.hbm_to_vmem [thread:$0]  %s0, 128, %s16, [#allocation3], 64, 64, 4
    $region5: #{tpu_custom_call.1} parent=1 // pred_fallthru
      _
    // Predicated region
    $region6: #{tpu_custom_call.1} parent=1 // pred_check
      _
    $region7: #{tpu_custom_call.1} parent=1 // pred_check_branch
      %23 = sbr.rel (0) target = $region9
    $region8: #{tpu_custom_call.1} parent=1 // pred_region
      %s25 = ssub.s32 1024, 1024
      %26 = vsyncadd [#allocation6], %s25
      %s27 = sshll.u32 [#allocation5], 4
      %s28 = int_to_ptr.vmem [resolvable:$true] %s27
      %33 = dma.hbm_to_vmem [thread:$0]  %s1, 1024, %s28, [#allocation6], 64, 64, 4
    $region9: #{tpu_custom_call.1} parent=1 // pred_fallthru
      _
    // Predicated region
    $region10: #{tpu_custom_call.1} parent=1 // pred_check
      _
    $region11: #{tpu_custom_call.1} parent=1 // pred_check_branch
      %35 = sbr.rel (0) target = $region13
    $region12: #{tpu_custom_call.1} parent=1 // pred_region
      %36 = dma.done [#allocation3], 128
    $region13: #{tpu_custom_call.1} parent=1 // pred_fallthru
      _
    // Predicated region
    $region14: #{tpu_custom_call.1} parent=1 // pred_check
      _
    $region15: #{tpu_custom_call.1} parent=1 // pred_check_branch
      %38 = sbr.rel (0) target = $region17
    $region16: #{tpu_custom_call.1} parent=1 // pred_region
      %39 = dma.done [#allocation6], 1024
    $region17: #{tpu_custom_call.1} parent=1 // pred_fallthru
      _
    %v41 = vld [vmem:[#allocation2] sm:$0xf]
    %v42 = vld [vmem:[#allocation2 + $0x4] sm:$0xf]
    %v43 = vld [vmem:[#allocation5] sm:$0xf]
    %v44 = vld [vmem:[#allocation5 + $0x4] sm:$0xf]
    %v45 = vld [vmem:[#allocation5 + $0x8] sm:$0xf]
    %v46 = vld [vmem:[#allocation5 + $0xc] sm:$0xf]
    %v47 = vld [vmem:[#allocation5 + $0x10] sm:$0xf]
    %v48 = vld [vmem:[#allocation5 + $0x14] sm:$0xf]
    %v49 = vld [vmem:[#allocation5 + $0x18] sm:$0xf]
    %v50 = vld [vmem:[#allocation5 + $0x1c] sm:$0xf]
    %v51 = vld [vmem:[#allocation5 + $0x20] sm:$0xf]
    %v52 = vld [vmem:[#allocation5 + $0x24] sm:$0xf]
    %v53 = vld [vmem:[#allocation5 + $0x28] sm:$0xf]
    %v54 = vld [vmem:[#allocation5 + $0x2c] sm:$0xf]
    %v55 = vld [vmem:[#allocation5 + $0x30] sm:$0xf]
    %v56 = vld [vmem:[#allocation5 + $0x34] sm:$0xf]
    %v57 = vld [vmem:[#allocation5 + $0x38] sm:$0xf]
    %v58 = vld [vmem:[#allocation5 + $0x3c] sm:$0xf]
    %v61 = vunpack.c.l.b16 %v41
    %v62 = vunpack.c.l.b16 %v42
    %v63 = vpack.c.b16 %v62, %v61
    %v81 = vunpack.c.l.b16 %v43
    %v82 = vunpack.c.l.b16 %v44
    %v83 = vunpack.c.l.b16 %v45
    %v84 = vunpack.c.l.b16 %v46
    %v85 = vunpack.c.l.b16 %v47
    %v86 = vunpack.c.l.b16 %v48
    %v87 = vunpack.c.l.b16 %v49
    %v88 = vunpack.c.l.b16 %v50
    %v89 = vunpack.c.l.b16 %v51
    %v90 = vunpack.c.l.b16 %v52
    %v91 = vunpack.c.l.b16 %v53
    %v92 = vunpack.c.l.b16 %v54
    %v93 = vunpack.c.l.b16 %v55
    %v94 = vunpack.c.l.b16 %v56
    %v95 = vunpack.c.l.b16 %v57
    %v96 = vunpack.c.l.b16 %v58
    %v97 = vpack.c.b16 %v82, %v81
    %v98 = vpack.c.b16 %v84, %v83
    %v99 = vpack.c.b16 %v86, %v85
    %v100 = vpack.c.b16 %v88, %v87
    %v101 = vpack.c.b16 %v90, %v89
    %v102 = vpack.c.b16 %v92, %v91
    %v103 = vpack.c.b16 %v94, %v93
    %v104 = vpack.c.b16 %v96, %v95
    %113 = vmatprep.subr.bf16.mxu0 0
    %114 = vmatpush1.bf16.msra.mxu0 %v97
    %115 = vmatprep.subr.bf16.mxu0 0
    %116 = vmatpush1.bf16.msra.mxu0 %v98
    %117 = vmatprep.subr.bf16.mxu0 0
    %118 = vmatpush1.bf16.msra.mxu0 %v99
    %119 = vmatprep.subr.bf16.mxu0 0
    %120 = vmatpush1.bf16.msra.mxu0 %v100
    %121 = vmatprep.subr.bf16.mxu0 0
    %122 = vmatpush1.bf16.msra.mxu0 %v101
    %123 = vmatprep.subr.bf16.mxu0 0
    %124 = vmatpush1.bf16.msra.mxu0 %v102
    %125 = vmatprep.subr.bf16.mxu0 0
    %126 = vmatpush1.bf16.msra.mxu0 %v103
    %127 = vmatprep.subr.bf16.mxu0 0
    %128 = vmatpush1.bf16.msra.mxu0 %v104
    %129 = vmatprep.subr.bf16.mxu0 0
    %130 = vmatpush1.bf16.msra.mxu0 0
    %131 = vmatprep.subr.bf16.mxu0 0
    %132 = vmatpush1.bf16.msra.mxu0 0
    %133 = vmatprep.subr.bf16.mxu0 0
    %134 = vmatpush1.bf16.msra.mxu0 0
    %135 = vmatprep.subr.bf16.mxu0 0
    %136 = vmatpush1.bf16.msra.mxu0 0
    %137 = vmatprep.subr.bf16.mxu0 0
    %138 = vmatpush1.bf16.msra.mxu0 0
    %139 = vmatprep.subr.bf16.mxu0 0
    %140 = vmatpush1.bf16.msra.mxu0 0
    %141 = vmatprep.subr.bf16.mxu0 0
    %142 = vmatpush1.bf16.msra.mxu0 0
    %143 = vmatprep.subr.bf16.mxu0 0
    %144 = vmatpush1.bf16.msra.mxu0 0
    %145 = vmatprep.mubr.bf16.mxu0 0
    %146 = vmatmul.mubr.bf16.gmra.mrb[0].mxu0 %v63
    %v147 = vpop.f32.mrb[0].mxu0
    %v148 = vadd.f32 0.0, %v147
    %v149 = vpop.f32.mrb[0].mxu0
    %v150 = vpop.f32.mrb[0].mxu0
    %v151 = vadd.f32 0.0, %v150
    %v152 = vpop.f32.mrb[0].mxu0
    %153 = vdwg.mxu0
    %p154 = scmp.eq.s32.totalorder 0, 0
    // Predicated region
    $region18: #{tpu_custom_call.1} parent=1 // pred_check
      %p155 = pneg %p154
    $region19: #{tpu_custom_call.1} parent=1 // pred_check_branch
      %157 = sbr.rel (%p155) target = $region21
    $region20: #{tpu_custom_call.1} parent=1 // pred_region
      %158 = vst [vmem:[#allocation7] sm:$0xff] %v148
      %159 = vst [vmem:[#allocation7 + $0x8] sm:$0xff] %v151
    $region21: #{tpu_custom_call.1} parent=1 // pred_fallthru
      _
    %p160 = scmp.gt.s32.totalorder 0, 0
    // Predicated region
    $region22: #{tpu_custom_call.1} parent=1 // pred_check
      %p161 = pneg %p160
    $region23: #{tpu_custom_call.1} parent=1 // pred_check_branch
      %163 = sbr.rel (%p161) target = $region25
    $region24: #{tpu_custom_call.1} parent=1 // pred_region
      %v164 = vld [vmem:[#allocation7] sm:$0xff]
      %v165 = vld [vmem:[#allocation7 + $0x8] sm:$0xff]
      %v166 = vadd.f32 %v164, %v148
      %v167 = vadd.f32 %v165, %v151
      %168 = vst [vmem:[#allocation7] sm:$0xff] %v166
      %169 = vst [vmem:[#allocation7 + $0x8] sm:$0xff] %v167
    $region25: #{tpu_custom_call.1} parent=1 // pred_fallthru
      _
    // Predicated region
    $region26: #{tpu_custom_call.1} parent=1 // pred_check
      _
    $region27: #{tpu_custom_call.1} parent=1 // pred_check_branch
      %171 = sbr.rel (0) target = $region29
    $region28: #{tpu_custom_call.1} parent=1 // pred_region
      %s173 = ssub.s32 256, 256
      %174 = vsyncadd [#allocation4], %s173
      %s175 = sshll.u32 [#allocation7], 4
      %s176 = int_to_ptr.vmem [resolvable:$true] %s175
      %181 = dma.vmem_to_hbm [thread:$0]  %s176, 256, %s2, [#allocation4], 128, 128, 8
    $region29: #{tpu_custom_call.1} parent=1 // pred_fallthru
      _
    // Predicated region
    $region30: #{tpu_custom_call.1} parent=1 // pred_check
      _
    $region31: #{tpu_custom_call.1} parent=1 // pred_check_branch
      %183 = sbr.rel (0) target = $region33
    $region32: #{tpu_custom_call.1} parent=1 // pred_region
      %184 = dma.done [#allocation4], 256
    $region33: #{tpu_custom_call.1} parent=1 // pred_fallthru
      _
    %185 = vsyncpa [#allocation3], 1
    %186 = vsyncpa [#allocation6], 1
    %187 = vsyncpa [#allocation4], 1

</llo_original>
